<compile_context>
chip_gen: v5e
topology: v5e:2x2
jax: 0.10.0
libtpu: 0.0.40
codegen_flags: <defaults>
</compile_context>

<pallas_src>
import jax
import jax.numpy as jnp
from jax.experimental import pallas as pl
from jax.experimental.pallas import tpu as pltpu


def _cdiv(a, b):
    return -(-a // b)


def _hue_shift_kernel(apply_ref, delta_ref, hue_ref, out_ref):
    # apply_ref: SMEM i32[1]      global Bernoulli gate (0 = skip, 1 = apply)
    # delta_ref: SMEM f32[B]      per-batch hue shift
    # hue_ref  : VMEM [1, bh, L]  tile of the (flattened) hue plane of batch b
    # out_ref  : VMEM [1, bh, L]  same tile of the aliased output
    b = pl.program_id(0)

    @pl.when(apply_ref[0] != 0)
    def _():
        x = hue_ref[...].astype(jnp.float32) + delta_ref[b]
        # wrap to [0, 1): x - floor(x) == x % 1.0 (sign-of-divisor semantics)
        out_ref[...] = (x - jnp.floor(x)).astype(out_ref.dtype)

    @pl.when(apply_ref[0] == 0)
    def _():
        # Skip path: bit-exact passthrough of the hue tile; the other C-1
        # channels never move at all thanks to the input/output alias.
        out_ref[...] = hue_ref[...]


def _choose_lane_width(n, max_lanes=1024):
    """Largest multiple of 128 that divides n (capped at max_lanes); 0 if none."""
    best = 0
    lane = 128
    while lane <= min(n, max_lanes):
        if n % lane == 0:
            best = lane
        lane += 128
    return best


def _choose_rows(n_rows, lanes, itemsize, batch,
                 budget_bytes=2 * 1024 * 1024, min_programs=4):
    """Rows per hue block.

    * aligned to the dtype's minimum sublane tile (8 f32 / 16 bf16 / 32 int8),
    * block stays within ~budget_bytes (4 live buffers << scoped VMEM on all
      generations; no vmem_limit_bytes needed),
    * shrunk until the grid has >= min_programs programs (>= 2 per v7x core)
      when the plane is big enough to allow it.
    Ragged last tiles are fine: the grid uses cdiv and Pallas masks the edge.
    """
    sub = max(8, 32 // itemsize)
    if n_rows <= sub:
        return n_rows  # full (sublane) dim — always a legal block
    budget_rows = max(sub, (budget_bytes // (lanes * itemsize)) // sub * sub)
    bh = min((n_rows // sub) * sub, budget_rows)
    bh = max(bh, sub)
    while bh > sub and batch * _cdiv(n_rows, bh) < min_programs:
        nxt = max(sub, ((bh // 2) // sub) * sub)
        if nxt == bh:
            break
        bh = nxt
    return bh


def random_hue_pallas(image, key, delta=18.0 / 255.0, p=0.5):
    """image: float[B, C, H, W] (NCHW, hue in channel 0).

    For the full in-place benefit of the output aliasing, donate `image` at the
    jit boundary (jax.jit(..., donate_argnums=(0,))); without donation XLA adds
    a defensive copy of the input (still correct, just more HBM traffic).
    """
    B, C, H, W = image.shape
    k_apply, k_delta = jax.random.split(key)
    apply = (jax.random.uniform(k_apply, ()) < p).astype(jnp.int32).reshape(1)
    deltas = jax.random.uniform(
        k_delta, (B,), minval=-delta, maxval=delta, dtype=jnp.float32
    )

    itemsize = image.dtype.itemsize
    HW = H * W

    # Lane-dense view of the hue plane when possible (free contiguous reshape).
    L = _choose_lane_width(HW)
    if L > 0:
        R = HW // L
        plane_shape = (B * C, R, L)
    else:
        # Awkward H*W (not divisible by 128): keep [B*C, H, W]; masked stores,
        # still correct.
        R, L = H, W
        plane_shape = (B * C, H, W)

    bh = _choose_rows(R, L, itemsize, B)
    n_row_tiles = _cdiv(R, bh)

    img3 = image.reshape(plane_shape)
    out3 = pl.pallas_call(
        _hue_shift_kernel,
        out_shape=jax.ShapeDtypeStruct(plane_shape, image.dtype),
        grid=(B, n_row_tiles),
        in_specs=[
            pl.BlockSpec(memory_space=pltpu.MemorySpace.SMEM),      # apply flag
            pl.BlockSpec(memory_space=pltpu.MemorySpace.SMEM),      # deltas
            pl.BlockSpec((1, bh, L), lambda b, h: (b * C, h, 0)),   # hue plane only
        ],
        out_specs=pl.BlockSpec((1, bh, L), lambda b, h: (b * C, h, 0)),
        # Alias the image (input index 2) to output 0: the C-1 untouched
        # channels never move through VMEM, they simply stay in place.
        input_output_aliases={2: 0},
        compiler_params=pltpu.CompilerParams(
            dimension_semantics=("parallel", "parallel")
        ),
        cost_estimate=pl.CostEstimate(
            flops=3 * B * H * W,
            transcendentals=0,
            bytes_accessed=2 * B * H * W * itemsize,
        ),
    )(apply, deltas, img3)
    return out3.reshape(B, C, H, W)


def _reference(image, key, delta=18.0 / 255.0, p=0.5):
    """Pure-JAX reference mirroring the PyTorch forward (same RNG draws)."""
    k_apply, k_delta = jax.random.split(key)
    apply = jax.random.uniform(k_apply, ()) < p
    deltas = jax.random.uniform(
        k_delta, (image.shape[0],), minval=-delta, maxval=delta, dtype=jnp.float32
    )
    hue = jnp.mod(image[:, 0, :, :] + deltas[:, None, None], 1.0)
    new = image.at[:, 0, :, :].set(hue)
    return jnp.where(apply, new, image)


if __name__ == "__main__":
    key = jax.random.PRNGKey(0)
    k_img, k_aug = jax.random.split(key)
    B, C, H, W = 2, 4, 16, 16

    def fresh_image():
        # deterministic; regenerated per call because the jitted fn donates it
        return jax.random.uniform(k_img, (B, C, H, W), dtype=jnp.float32)

    run = jax.jit(random_hue_pallas, donate_argnums=(0,))

    # p=1.0 -> Bernoulli gate always true: the hue shift is applied.
    out_on = jax.block_until_ready(run(fresh_image(), k_aug, p=1.0))
    ref_on = jax.block_until_ready(_reference(fresh_image(), k_aug, p=1.0))
    assert out_on.shape == (B, C, H, W) and out_on.dtype == jnp.float32
    assert jnp.allclose(out_on, ref_on, atol=1e-6), "mismatch vs reference (apply)"
    # untouched channels must come back bit-identical through the alias path
    assert jnp.array_equal(out_on[:, 1:], fresh_image()[:, 1:]), "non-hue channels changed"

    # p=0.0 -> gate false: image passes through bit-identically.
    out_off = jax.block_until_ready(run(fresh_image(), k_aug, p=0.0))
    ref_off = jax.block_until_ready(_reference(fresh_image(), k_aug, p=0.0))
    assert jnp.array_equal(out_off, ref_off), "mismatch vs reference (skip)"

    print("KERNEL_OK")
</pallas_src>

<mosaic_0001>
module attributes {stable_mosaic.version = 11 : i64} {
  func.func @_hue_shift_kernel(%arg0: i32, %arg1: i32, %arg2: memref<1xi32, #tpu.memory_space<smem>>, %arg3: memref<2xf32, #tpu.memory_space<smem>>, %arg4: memref<1x1x256xf32, #tpu.memory_space<vmem>>, %arg5: memref<1x1x256xf32, #tpu.memory_space<vmem>>) attributes {dimension_semantics = [#tpu.dimension_semantics<parallel>, #tpu.dimension_semantics<parallel>], iteration_bounds = array<i64: 2, 1>, scalar_prefetch = 0 : i64, scratch_operands = 0 : i64, tpu.core_type = #tpu.core_type<tc>, window_params = [{transform_indices = @transform_0, window_bounds = array<i64: 1>}, {transform_indices = @transform_1, window_bounds = array<i64: 2>}, {transform_indices = @transform_2, window_bounds = array<i64: 1, 1, 256>}, {transform_indices = @transform_3, window_bounds = array<i64: 1, 1, 256>}]} {
    %c0 = arith.constant 0 : index
    %0 = memref.load %arg2[%c0] : memref<1xi32, #tpu.memory_space<smem>>
    %c0_i32 = arith.constant 0 : i32
    %1 = arith.cmpi ne, %0, %c0_i32 : i32
    %2 = arith.extui %1 : i1 to i32
    %c0_i32_0 = arith.constant 0 : i32
    %3 = arith.cmpi ne, %2, %c0_i32_0 : i32
    scf.if %3 {
      %c0_4 = arith.constant 0 : index
      %c0_5 = arith.constant 0 : index
      %c0_6 = arith.constant 0 : index
      %8 = vector.load %arg4[%c0_4, %c0_5, %c0_6] : memref<1x1x256xf32, #tpu.memory_space<vmem>>, vector<1x1x256xf32>
      %9 = arith.index_cast %arg0 : i32 to index
      %10 = memref.load %arg3[%9] : memref<2xf32, #tpu.memory_space<smem>>
      %11 = vector.broadcast %10 : f32 to vector<1x1x256xf32>
      %12 = arith.addf %8, %11 : vector<1x1x256xf32>
      %13 = math.floor %12 : vector<1x1x256xf32>
      %14 = arith.subf %12, %13 : vector<1x1x256xf32>
      %c0_7 = arith.constant 0 : index
      %c0_8 = arith.constant 0 : index
      %c0_9 = arith.constant 0 : index
      %15 = vector.load %arg5[%c0_7, %c0_8, %c0_9] : memref<1x1x256xf32, #tpu.memory_space<vmem>>, vector<1x1x256xf32>
      tpu.vector_store %arg5[%c0_7, %c0_8, %c0_9], %14 {strides = array<i32>} : memref<1x1x256xf32, #tpu.memory_space<vmem>>, vector<1x1x256xf32>,
    } else {
    }
    %c0_1 = arith.constant 0 : index
    %4 = memref.load %arg2[%c0_1] : memref<1xi32, #tpu.memory_space<smem>>
    %c0_i32_2 = arith.constant 0 : i32
    %5 = arith.cmpi eq, %4, %c0_i32_2 : i32
    %6 = arith.extui %5 : i1 to i32
    %c0_i32_3 = arith.constant 0 : i32
    %7 = arith.cmpi ne, %6, %c0_i32_3 : i32
    scf.if %7 {
      %c0_4 = arith.constant 0 : index
      %c0_5 = arith.constant 0 : index
      %c0_6 = arith.constant 0 : index
      %8 = vector.load %arg4[%c0_4, %c0_5, %c0_6] : memref<1x1x256xf32, #tpu.memory_space<vmem>>, vector<1x1x256xf32>
      %c0_7 = arith.constant 0 : index
      %c0_8 = arith.constant 0 : index
      %c0_9 = arith.constant 0 : index
      %9 = vector.load %arg5[%c0_7, %c0_8, %c0_9] : memref<1x1x256xf32, #tpu.memory_space<vmem>>, vector<1x1x256xf32>
      tpu.vector_store %arg5[%c0_7, %c0_8, %c0_9], %8 {strides = array<i32>} : memref<1x1x256xf32, #tpu.memory_space<vmem>>, vector<1x1x256xf32>,
    } else {
    }
    return
  }
  func.func @transform_0(%arg0: i32, %arg1: i32) -> i32 {
    %c0_i32 = arith.constant 0 : i32
    %c0_i32_0 = arith.constant 0 : i32
    return %c0_i32 : i32
  }
  func.func @transform_1(%arg0: i32, %arg1: i32) -> i32 {
    %c0_i32 = arith.constant 0 : i32
    %c0_i32_0 = arith.constant 0 : i32
    return %c0_i32 : i32
  }
  func.func @transform_2(%arg0: i32, %arg1: i32) -> (i32, i32, i32) {
    %c4_i32 = arith.constant 4 : i32
    %0 = arith.muli %arg0, %c4_i32 : i32
    %c0_i32 = arith.constant 0 : i32
    %c0_i32_0 = arith.constant 0 : i32
    return %0, %arg1, %c0_i32 : i32, i32, i32
  }
  func.func @transform_3(%arg0: i32, %arg1: i32) -> (i32, i32, i32) {
    %c4_i32 = arith.constant 4 : i32
    %0 = arith.muli %arg0, %c4_i32 : i32
    %c0_i32 = arith.constant 0 : i32
    %c0_i32_0 = arith.constant 0 : i32
    return %0, %arg1, %c0_i32 : i32, i32, i32
  }
}

</mosaic_0001>

<llo_original>
// kernel: random_hue_pallas.11
$region0: #{random_hue_pallas.11}
  #allocation0 [shape = 'u32[]', space=smem, size = 0x4, offset = 0x4, fixed_abs, tag = 'smem constant byte address 0x4 - core index']
  #allocation1 [shape = 'u32[72,128]{1,0:T(1,128)}', space=vmem, size = 0x9000, scoped, tag = 'internal scratch']
  #allocation2 [shape = 's32[1]{0:T(128)S(6)}', space=smem, size = 0x200, scoped, tag = 'scoped memory for random_hue_pallas.11']
  %s0 = inlined_call_operand.<no memory space> [shape: s32[1], index: 0, kind: input, shape index: {}]
  %s1 = inlined_call_operand.vmem [shape: f32[2], index: 1, kind: input, shape index: {}]
  %s2 = inlined_call_operand.vmem [shape: f32[8,1,256], index: 2, kind: input, shape index: {}, may-alias: {2,3}]
  %s3 = inlined_call_operand.vmem [shape: f32[8,1,256], index: 3, kind: output, shape index: {}, may-alias: {2,3}]
  %s4 = sld [smem:[#allocation0]]
  $region57: #{random_hue_pallas.11} parent=0
    _
  %s6 = ssub.s32 1, %s4
  %s7 = scalar_select 0, %s6, %s4
  %8 = sst [smem:[#allocation2]] %s0
  $region1: #{random_hue_pallas.11} parent=0
    #allocation3 [shape = 'u8[512]{0}', space=smem, size = 0x200, scoped, tag = 'input window, operand 1, single buffered']
    #allocation4 [shape = 's32[2]{0}', space=sflag, size = 0x8, scoped, tag = 'scoped memory for random_hue_pallas.11']
    %9 = vsyncpa [#allocation4], 0
    loop: start=0, step=1, limit=4
    $region2: #{random_hue_pallas.11} parent=1 // loop_pre_header
      _
    $region3: #{random_hue_pallas.11} parent=1 // loop_header
      %s11 = sphi 0, %s15
      %p12 = scmp.ge.s32.totalorder %s11, 4
      %s18 = sphi 0, %s30
      %s19 = sphi 0, %s26
      %s20 = sphi 0, %s18
      %s21 = sphi 0, %s19
      %s22 = sphi 0, %s20
      %s23 = sphi 0, %s21
      %s31 = sphi 0, %s31
      %s33 = sphi 0, %s31
      %s34 = sphi 0, %s33
      %s48 = sphi 0, %s34
      %s52 = sphi 0, %s52
      %s54 = sphi 0, %s52
      %s55 = sphi 0, %s54
      %s69 = sphi 0, %s55
      %s79 = sphi 0, %s81
      %s82 = sphi 0, %s79
      %s83 = sphi 0, %s82
      %s99 = sphi 0, %s83
      %s109 = sphi 0, %s111
      %s112 = sphi 0, %s109
      %s113 = sphi 0, %s112
      %s129 = sphi 0, %s113
    $region4: #{random_hue_pallas.11} parent=1 // loop_header_branch
      %14 = sbr.rel (%p12) target = $region8
    $region5: #{random_hue_pallas.11} parent=1 // loop_body
      %s16 = ssub.s32 %s11, 1
      %s17 = ssub.s32 %s11, 2
      %s24 = sadd.s32 1, %s19
      %p25 = scmp.ge.s32.totalorder %s24, 1
      %s26 = scalar_select %p25, 0, %s24
      %s27 = sadd.s32 1, %s18
      %s28 = scalar_select %p25, %s27, %s18
      %p29 = scmp.ge.s32.totalorder %s28, 2
      %s30 = scalar_select %p29, 0, %s28
      %s32 = sadd.s32 %s31, 1
      %p35 = scmp.eq.s32.totalorder %s11, 1
      %p36 = scmp.ne.s32.totalorder %s31, %s33
      %p37 = scmp.eq.s32.totalorder %s11, 0
      %p38 = por %p36, %p37
      %p39 = scmp.ne.s32.totalorder %s31, %s33
      %p40 = scmp.eq.s32.totalorder %s16, 1
      %p41 = por %p39, %p40
      %p42 = scmp.ne.s32.totalorder %s33, %s34
      %p43 = scmp.eq.s32.totalorder %s16, 0
      %p44 = por %p42, %p43
      %p45 = scmp.ne.s32.totalorder %s33, %s34
      %p46 = scmp.eq.s32.totalorder %s17, 1
      %p47 = por %p45, %p46
      %p49 = scmp.ne.s32.totalorder %s34, %s48
      %p50 = scmp.eq.s32.totalorder %s17, 0
      %p51 = por %p49, %p50
      %s53 = sadd.s32 %s52, 1
      %p56 = scmp.eq.s32.totalorder %s11, 1
      %p57 = scmp.ne.s32.totalorder %s52, %s54
      %p58 = scmp.eq.s32.totalorder %s11, 0
      %p59 = por %p57, %p58
      %p60 = scmp.ne.s32.totalorder %s52, %s54
      %p61 = scmp.eq.s32.totalorder %s16, 1
      %p62 = por %p60, %p61
      %p63 = scmp.ne.s32.totalorder %s54, %s55
      %p64 = scmp.eq.s32.totalorder %s16, 0
      %p65 = por %p63, %p64
      %p66 = scmp.ne.s32.totalorder %s54, %s55
      %p67 = scmp.eq.s32.totalorder %s17, 1
      %p68 = por %p66, %p67
      %p70 = scmp.ne.s32.totalorder %s55, %s69
      %p71 = scmp.eq.s32.totalorder %s17, 0
      %p72 = por %p70, %p71
      %s73 = smul.u32 %s18, 4
      %s74 = smul.u32 %s30, 4
      %s75 = ssub.s32 %s73, %s74
      %s76 = ssub.s32 %s19, %s26
      %s77 = sor.u32 %s75, %s76
      %p78 = scmp.eq.s32.totalorder %s77, 0
      %s80 = sadd.s32 %s79, 1
      %s81 = scalar_select %p78, %s79, %s80
      %p84 = pneg %p78
      %p85 = scmp.eq.s32.totalorder %s11, 1
      %p86 = por %p84, %p85
      %p87 = scmp.ne.s32.totalorder %s79, %s82
      %p88 = scmp.eq.s32.totalorder %s11, 0
      %p89 = por %p87, %p88
      %p90 = scmp.ne.s32.totalorder %s79, %s82
      %p91 = scmp.eq.s32.totalorder %s16, 1
      %p92 = por %p90, %p91
      %p93 = scmp.ne.s32.totalorder %s82, %s83
      %p94 = scmp.eq.s32.totalorder %s16, 0
      %p95 = por %p93, %p94
      %p96 = scmp.ne.s32.totalorder %s82, %s83
      %p97 = scmp.eq.s32.totalorder %s17, 1
      %p98 = por %p96, %p97
      %p100 = scmp.ne.s32.totalorder %s83, %s99
      %p101 = scmp.eq.s32.totalorder %s17, 0
      %p102 = por %p100, %p101
      %s103 = smul.u32 %s18, 4
      %s104 = smul.u32 %s30, 4
      %s105 = ssub.s32 %s103, %s104
      %s106 = ssub.s32 %s19, %s26
      %s107 = sor.u32 %s105, %s106
      %p108 = scmp.eq.s32.totalorder %s107, 0
      %s110 = sadd.s32 %s109, 1
      %s111 = scalar_select %p108, %s109, %s110
      %p114 = pneg %p108
      %p115 = scmp.eq.s32.totalorder %s11, 1
      %p116 = por %p114, %p115
      %p117 = scmp.ne.s32.totalorder %s109, %s112
      %p118 = scmp.eq.s32.totalorder %s11, 0
      %p119 = por %p117, %p118
      %p120 = scmp.ne.s32.totalorder %s109, %s112
      %p121 = scmp.eq.s32.totalorder %s16, 1
      %p122 = por %p120, %p121
      %p123 = scmp.ne.s32.totalorder %s112, %s113
      %p124 = scmp.eq.s32.totalorder %s16, 0
      %p125 = por %p123, %p124
      %p126 = scmp.ne.s32.totalorder %s112, %s113
      %p127 = scmp.eq.s32.totalorder %s17, 1
      %p128 = por %p126, %p127
      %p130 = scmp.ne.s32.totalorder %s113, %s129
      %p131 = scmp.eq.s32.totalorder %s17, 0
      %p132 = por %p130, %p131
      %p133 = scmp.le.s32.totalorder 1, %s11
      %p134 = scmp.lt.s32.totalorder %s11, 3
      %p135 = pnand %p133, %p134
      %p136 = pneg %p135
      // Predicated region
      $region9: #{random_hue_pallas.11} parent=5 // pred_check
        _
      $region10: #{random_hue_pallas.11} parent=5 // pred_check_branch
        %138 = sbr.rel (%p135) target = $region12
      $region11: #{random_hue_pallas.11} parent=5 // pred_region
        %s139 = ssub.s32 %s11, 1
        // Predicated region
        $region13: #{random_hue_pallas.11} parent=11 // pred_check
          %p140 = pneg %p44
        $region14: #{random_hue_pallas.11} parent=11 // pred_check_branch
          %142 = sbr.rel (%p140) target = $region16
        $region15: #{random_hue_pallas.11} parent=11 // pred_region
          _
        $region16: #{random_hue_pallas.11} parent=11 // pred_fallthru
          _
        // Predicated region
        $region17: #{random_hue_pallas.11} parent=11 // pred_check
          %p143 = pneg %p65
        $region18: #{random_hue_pallas.11} parent=11 // pred_check_branch
          %145 = sbr.rel (%p143) target = $region20
        $region19: #{random_hue_pallas.11} parent=11 // pred_region
          %147 = vsyncadd [#allocation4], 0
          %s149 = sshll.u32 %s1, 4
          %s150 = int_to_ptr.vmem [resolvable:$true] %s149
          %152 = dma.vmem_to_smem %s150, 16, [#allocation3], [#allocation4]
        $region20: #{random_hue_pallas.11} parent=11 // pred_fallthru
          _
      $region12: #{random_hue_pallas.11} parent=5 // pred_fallthru
        _
      %p153 = scmp.lt.s32.totalorder %s11, 2
      // Predicated region
      $region21: #{random_hue_pallas.11} parent=5 // pred_check
        %p154 = pneg %p153
      $region22: #{random_hue_pallas.11} parent=5 // pred_check_branch
        %156 = sbr.rel (%p154) target = $region24
      $region23: #{random_hue_pallas.11} parent=5 // pred_region
        // Predicated region
        $region25: #{random_hue_pallas.11} parent=23 // pred_check
          %p157 = pneg %p89
        $region26: #{random_hue_pallas.11} parent=23 // pred_check_branch
          %159 = sbr.rel (%p157) target = $region28
        $region27: #{random_hue_pallas.11} parent=23 // pred_region
          %s160 = smul.u32 %s18, 4
          %p161 = scmp.lt.s32.totalorder %s160, 7
          %s162 = scalar_select %p161, %s160, 7
          %p163 = scmp.lt.s32.totalorder %s19, 0
          %s164 = scalar_select %p163, %s19, 0
          %s165 = smul.addr %s164, 2
          %s166 = smul.addr %s162, 2
          %s167 = sadd.s32 %s165, %s166
          %s168 = scalar_lea.vmem %s2, %s167
          %s169 = smul.u32 %s18, 4
        $region28: #{random_hue_pallas.11} parent=23 // pred_fallthru
          _
      $region24: #{random_hue_pallas.11} parent=5 // pred_fallthru
        _
      %p170 = scmp.le.s32.totalorder 1, %s11
      %p171 = scmp.lt.s32.totalorder %s11, 3
      %p172 = pnand %p170, %p171
      %p173 = pneg %p172
      // Predicated region
      $region29: #{random_hue_pallas.11} parent=5 // pred_check
        _
      $region30: #{random_hue_pallas.11} parent=5 // pred_check_branch
        %175 = sbr.rel (%p172) target = $region32
      $region31: #{random_hue_pallas.11} parent=5 // pred_region
        %s176 = ssub.s32 %s11, 1
        // Predicated region
        $region33: #{random_hue_pallas.11} parent=31 // pred_check
          %p177 = pneg %p65
        $region34: #{random_hue_pallas.11} parent=31 // pred_check_branch
          %179 = sbr.rel (%p177) target = $region36
        $region35: #{random_hue_pallas.11} parent=31 // pred_region
          %181 = dma.done [#allocation4], 16
        $region36: #{random_hue_pallas.11} parent=31 // pred_fallthru
          _
        %182 = sfence
        %p183 = pneg %p44
        %p184 = pneg %p41
        %p185 = pneg %p65
        %p186 = pneg %p62
        %s187 = smul.u32 %s20, 4
        %p188 = scmp.lt.s32.totalorder %s187, 7
        %s189 = scalar_select %p188, %s187, 7
        %p190 = scmp.lt.s32.totalorder %s21, 0
        %s191 = scalar_select %p190, %s21, 0
        %s192 = smul.addr %s191, 2
        %s193 = smul.addr %s189, 2
        %s194 = sadd.s32 %s192, %s193
        %s195 = scalar_lea.vmem %s2, %s194
        %p196 = pneg %p95
        %p197 = pneg %p92
        %p198 = pneg %p125
        %p199 = pneg %p122
        %s200 = smul.u32 %s20, 4
        %p201 = scmp.lt.s32.totalorder %s200, 7
        %s202 = scalar_select %p201, %s200, 7
        %p203 = scmp.lt.s32.totalorder %s21, 0
        %s204 = scalar_select %p203, %s21, 0
        %s205 = smul.addr %s204, 2
        %s206 = smul.addr %s202, 2
        %s207 = sadd.s32 %s205, %s206
        %s208 = scalar_lea.vmem %s3, %s207
        %s209 = smul.u32 %s20, 4
        %p210 = scmp.lt.s32.totalorder %s209, 7
        %s211 = scalar_select %p210, %s209, 7
        %p212 = scmp.lt.s32.totalorder %s21, 0
        %s213 = scalar_select %p212, %s21, 0
        %s214 = smul.addr %s213, 2
        %s215 = smul.addr %s211, 2
        %s216 = sadd.s32 %s214, %s215
        %s217 = scalar_lea.vmem %s2, %s216
        %s218 = smul.u32 %s20, 4
        %s219 = smul.u32 %s20, 4
        %p220 = scmp.lt.s32.totalorder %s219, 7
        %s221 = scalar_select %p220, %s219, 7
        %p222 = scmp.lt.s32.totalorder %s21, 0
        %s223 = scalar_select %p222, %s21, 0
        %s224 = smul.addr %s223, 2
        %s225 = smul.addr %s221, 2
        %s226 = sadd.s32 %s224, %s225
        %s227 = scalar_lea.vmem %s3, %s226
        %s228 = smul.u32 %s20, 4
        %s229 = sld [smem:[#allocation2]]
        %p230 = scmp.ne.s32.totalorder %s229, 0
        // Predicated region
        $region37: #{random_hue_pallas.11} parent=31 // pred_check
          %p231 = pneg %p230
        $region38: #{random_hue_pallas.11} parent=31 // pred_check_branch
          %233 = sbr.rel (%p231) target = $region40
        $region39: #{random_hue_pallas.11} parent=31 // pred_region
          %v234 = vld [vmem:[%s217] sm:$0x3]
          %s235 = sld [smem:[#allocation3 + %s20]]
          %v236 = vstv %s235
          %v237 = vadd.f32 %v234, %v236
          %v238 = vfloor.f32 %v237
          %v239 = vsub.f32 %v237, %v238
          %v240 = vlaneseq
          %vm241 = vcmp.ge.s32.totalorder %v240, 0
          %vm242 = vcmp.lt.s32.totalorder %v240, 256
          %vm243 = vmand %vm241, %vm242
          %244 = vst.msk [vmem:[%s227] sm:$0x3] %vm243, %v239
        $region40: #{random_hue_pallas.11} parent=31 // pred_fallthru
          _
        %s245 = sld [smem:[#allocation2]]
        %p246 = scmp.eq.s32.totalorder %s245, 0
        // Predicated region
        $region41: #{random_hue_pallas.11} parent=31 // pred_check
          %p247 = pneg %p246
        $region42: #{random_hue_pallas.11} parent=31 // pred_check_branch
          %249 = sbr.rel (%p247) target = $region44
        $region43: #{random_hue_pallas.11} parent=31 // pred_region
          %v250 = vld [vmem:[%s217] sm:$0x3]
          %v251 = vlaneseq
          %vm252 = vcmp.ge.s32.totalorder %v251, 0
          %vm253 = vcmp.lt.s32.totalorder %v251, 256
          %vm254 = vmand %vm252, %vm253
          %255 = vst.msk [vmem:[%s227] sm:$0x3] %vm254, %v250
        $region44: #{random_hue_pallas.11} parent=31 // pred_fallthru
          _
        %s256 = smul.u32 %s20, 4
        %p257 = scmp.lt.s32.totalorder %s256, 7
        %s258 = scalar_select %p257, %s256, 7
        %p259 = scmp.lt.s32.totalorder %s21, 0
        %s260 = scalar_select %p259, %s21, 0
        %s261 = smul.addr %s260, 2
        %s262 = smul.addr %s258, 2
        %s263 = sadd.s32 %s261, %s262
        %s264 = scalar_lea.vmem %s3, %s263
        // Predicated region
        $region45: #{random_hue_pallas.11} parent=31 // pred_check
          %p265 = pneg %p122
        $region46: #{random_hue_pallas.11} parent=31 // pred_check_branch
          %267 = sbr.rel (%p265) target = $region48
        $region47: #{random_hue_pallas.11} parent=31 // pred_region
          %s268 = smul.u32 %s20, 4
        $region48: #{random_hue_pallas.11} parent=31 // pred_fallthru
          _
      $region32: #{random_hue_pallas.11} parent=5 // pred_fallthru
        _
      %p269 = scmp.le.s32.totalorder 2, %s11
      // Predicated region
      $region49: #{random_hue_pallas.11} parent=5 // pred_check
        %p270 = pneg %p269
      $region50: #{random_hue_pallas.11} parent=5 // pred_check_branch
        %272 = sbr.rel (%p270) target = $region52
      $region51: #{random_hue_pallas.11} parent=5 // pred_region
        %s273 = ssub.s32 %s11, 2
        // Predicated region
        $region53: #{random_hue_pallas.11} parent=51 // pred_check
          %p274 = pneg %p128
        $region54: #{random_hue_pallas.11} parent=51 // pred_check_branch
          %276 = sbr.rel (%p274) target = $region56
        $region55: #{random_hue_pallas.11} parent=51 // pred_region
          %s277 = smul.u32 %s22, 4
          %p278 = scmp.lt.s32.totalorder %s277, 7
          %s279 = scalar_select %p278, %s277, 7
          %p280 = scmp.lt.s32.totalorder %s23, 0
          %s281 = scalar_select %p280, %s23, 0
          %s282 = smul.addr %s281, 2
          %s283 = smul.addr %s279, 2
          %s284 = sadd.s32 %s282, %s283
          %s285 = scalar_lea.vmem %s3, %s284
        $region56: #{random_hue_pallas.11} parent=51 // pred_fallthru
          _
      $region52: #{random_hue_pallas.11} parent=5 // pred_fallthru
        _
    $region6: #{random_hue_pallas.11} parent=1 // loop_footer
      %s15 = sadd.s32 1, %s11
    $region7: #{random_hue_pallas.11} parent=1 // loop_footer_branch
      %10 = sbr.rel target = $region3
    $region8: #{random_hue_pallas.11} parent=1 // loop_exit
      _
    %286 = vsyncpa [#allocation4], 1
    %s287 = scalar_lea.sflag [#allocation4], 1
    %288 = vsyncpa %s287, 1

</llo_original>
